<compile_context>
chip_gen: v6e
topology: v6e:2x2x1
jax: 0.10.0
libtpu: 0.0.40
codegen_flags: <defaults>
</compile_context>

<pallas_src>
import math

import jax
import jax.numpy as jnp
from jax.experimental import pallas as pl
from jax.experimental.pallas import tpu as pltpu


# ----------------------------------------------------------------------------
# Pallas kernels
# ----------------------------------------------------------------------------

def _raster_kernel(idx_ref, wf_ref, out_ref, acc_ref):
    """Point rasterization (trilinear scatter-add) as an M-tiled MXU matmul.

    idx_ref: (1, TM, 1) int32  flat grid index of each (point, corner)
    wf_ref : (1, F, TM) f32    weight * feature, channel-major (M on lane axis)
    out_ref: (1, F, TG) f32    scattered field for the current G tile
    acc_ref: (F, TG)    f32    VMEM accumulator (resident across the M axis)
    """
    j = pl.program_id(1)          # G-tile index
    k = pl.program_id(2)          # M-tile index (reduction axis, last in grid)

    @pl.when(k == 0)
    def _init():
        acc_ref[...] = jnp.zeros_like(acc_ref)

    tm = idx_ref.shape[1]
    tg = out_ref.shape[-1]
    # Apply the tile offset to the small (TM, 1) operand, not the (TM, TG) iota.
    local = idx_ref[0] - j * tg                                       # (TM, 1)
    cols = jax.lax.broadcasted_iota(jnp.int32, (tm, tg), 1)           # (TM, TG)
    onehot = (local == cols).astype(jnp.float32)                      # (TM, TG)
    # scatter-add == dense matmul with the one-hot selection matrix (MXU)
    acc_ref[...] += jnp.dot(wf_ref[0], onehot,
                            preferred_element_type=jnp.float32)

    @pl.when(k == pl.num_programs(2) - 1)
    def _finalize():
        out_ref[0] = acc_ref[...]


def _make_spectral_pow2_kernel(grid, sigma, eps):
    """Spectral Poisson filter; frequencies + scale rebuilt in-kernel (pow2 grid).

    chi_tilde = g/(2*pi*(|u|^2+eps)) * sum_k u_k * (vi_k - i*vr_k)
    vr_ref/vi_ref: (1, 3, TR, 128) f32 (real/imag of fftn(v))
    re_ref/im_ref: (1, TR, 128)    f32
    """
    rx, ry, rz = grid
    sz = int(math.log2(rz))
    sy = int(math.log2(ry))
    gauss_coef = -2.0 * (float(sigma) / float(rx)) ** 2
    two_pi = 2.0 * math.pi
    hx, hy, hz = (rx - 1) // 2, (ry - 1) // 2, (rz - 1) // 2

    def kernel(vr_ref, vi_ref, re_ref, im_ref):
        tr = re_ref.shape[1]
        row0 = pl.program_id(1) * tr
        rows = jax.lax.broadcasted_iota(jnp.int32, (tr, 128), 0) + row0
        lanes = jax.lax.broadcasted_iota(jnp.int32, (tr, 128), 1)
        flat = rows * 128 + lanes                                  # flat grid id
        # x, y, z via shifts/masks (grid dims are powers of two)
        z = jnp.bitwise_and(flat, rz - 1)
        y = jnp.bitwise_and(jnp.right_shift(flat, sz), ry - 1)
        x = jnp.right_shift(flat, sz + sy)
        # fftfreq(n, d=1/n): k for k <= (n-1)//2 else k - n
        ux = jnp.where(x <= hx, x, x - rx).astype(jnp.float32)
        uy = jnp.where(y <= hy, y, y - ry).astype(jnp.float32)
        uz = jnp.where(z <= hz, z, z - rz).astype(jnp.float32)
        usq = ux * ux + uy * uy + uz * uz
        scale = jnp.exp(gauss_coef * usq) / (two_pi * (usq + eps))   # EUP exp/div
        re_ref[0] = scale * (ux * vi_ref[0, 0]
                             + uy * vi_ref[0, 1]
                             + uz * vi_ref[0, 2])
        im_ref[0] = -scale * (ux * vr_ref[0, 0]
                              + uy * vr_ref[0, 1]
                              + uz * vr_ref[0, 2])

    return kernel


def _spectral_kernel_hbm(vr_ref, vi_ref, us_ref, re_ref, im_ref):
    """Fallback spectral filter (non-power-of-two grids); `us` precomputed on host.

    us = u * g / (2*pi*(|u|^2 + eps))
    """
    re_ref[0] = (us_ref[0] * vi_ref[0, 0]
                 + us_ref[1] * vi_ref[0, 1]
                 + us_ref[2] * vi_ref[0, 2])
    im_ref[0] = -(us_ref[0] * vr_ref[0, 0]
                  + us_ref[1] * vr_ref[0, 1]
                  + us_ref[2] * vr_ref[0, 2])


def _normalize_kernel(sc_ref, chi_ref, out_ref):
    """chi = scale * (chi_prime - mean); mean/scale are per-batch SMEM scalars.

    sc_ref : (B, 2) f32 SMEM scalar-prefetch  [:,0]=mean, [:,1]=0.5/|chi0 - mean|
    """
    b = pl.program_id(0)
    mean = sc_ref[b, 0]
    scale = sc_ref[b, 1]
    out_ref[...] = (chi_ref[...] - mean) * scale


# ----------------------------------------------------------------------------
# Host-side glue (tiling, index/weight computation, FFT plumbing)
# ----------------------------------------------------------------------------

def _vmem_capacity_bytes():
    try:
        return int(pltpu.get_tpu_info().vmem_capacity_bytes)
    except Exception:
        return 64 << 20   # v7x per-core physical VMEM: the most conservative


def _largest_tile(total, multiple, cap):
    """Largest divisor of `total` that is a multiple of `multiple` and <= cap.

    `total` must be a multiple of `multiple` (so the search always succeeds);
    no silent fall-through to `total` for over-budget awkward factorizations.
    """
    if total % multiple != 0:
        raise ValueError(f"{total} is not a multiple of {multiple}")
    cap = max(multiple, min(total, cap))
    t = (cap // multiple) * multiple
    while t >= multiple:
        if total % t == 0:
            return t
        t -= multiple
    raise ValueError(f"no {multiple}-multiple tile dividing {total} <= {cap}")


def _is_pow2(n):
    return n > 0 and (n & (n - 1)) == 0


def _trilinear_setup(points, grid):
    """Shared trilinear neighbor indices + weights (matches the torch code)."""
    B, N, dim = points.shape
    rx, ry, rz = grid
    vc_i = jnp.array(grid, jnp.int32)
    vs = 1.0 / jnp.array(grid, jnp.float32)
    scaled = points / vs
    lower = jnp.remainder(jnp.floor(scaled).astype(jnp.int32), vc_i)
    upper = jnp.remainder(jnp.ceil(scaled).astype(jnp.int32), vc_i)
    comb = jnp.stack(
        jnp.meshgrid(*([jnp.arange(2)] * dim), indexing="ij"), axis=-1
    ).reshape(2 ** dim, dim)                                      # (8, 3)
    comb_b = comb[None, None, :, :]                               # (1, 1, 8, 3)
    nidx = jnp.where(comb_b == 0, lower[:, :, None, :], upper[:, :, None, :])
    lower_c = lower.astype(jnp.float32) * vs
    upper_c = (lower.astype(jnp.float32) + 1.0) * vs
    ncoords = jnp.where(comb_b == 0, upper_c[:, :, None, :], lower_c[:, :, None, :])
    ndist = jnp.abs(points[:, :, None, :] - ncoords) / vs
    weights = jnp.prod(ndist, axis=-1)                            # (B, N, 8)
    flat_idx = nidx[..., 0] * (ry * rz) + nidx[..., 1] * rz + nidx[..., 2]
    m = N * (2 ** dim)
    return flat_idx.reshape(B, m).astype(jnp.int32), weights.reshape(B, m)


def _fft_frequencies_flat(grid):
    rx, ry, rz = grid
    fx = jnp.fft.fftfreq(rx, d=1.0 / rx).astype(jnp.float32)
    fy = jnp.fft.fftfreq(ry, d=1.0 / ry).astype(jnp.float32)
    fz = jnp.fft.fftfreq(rz, d=1.0 / rz).astype(jnp.float32)
    ux, uy, uz = jnp.meshgrid(fx, fy, fz, indexing="ij")
    return jnp.stack([ux.reshape(-1), uy.reshape(-1), uz.reshape(-1)], axis=0)  # (3, G)


def dpsr_forward(points, normals, grid=(16, 16, 16), sigma=2, eps=1e-6):
    B, N, dim = points.shape
    F = normals.shape[2]
    assert dim == 3 and F == 3, "DPSR expects 3-D points with 3-D normals"
    if B != 1:
        # Literal PyTorch `chi_prime - mean(chi_c, -1)` broadcast only matches
        # per-batch subtraction when B == 1.
        raise NotImplementedError("DPSR normalization semantics require batch == 1")
    rx, ry, rz = grid
    G = rx * ry * rz
    assert G % 128 == 0, "flattened grid must be a multiple of 128"
    R = G // 128
    M = N * (2 ** dim)

    vmem_cap = _vmem_capacity_bytes()
    big_vmem = vmem_cap >= (100 << 20)      # v5e/v6e (128 MiB) vs v7x (64 MiB)

    # ---------------- trilinear indices / weights ----------------
    flat_idx, weights = _trilinear_setup(points, grid)            # (B, M), (B, M)

    feat8 = jnp.repeat(normals, 2 ** dim, axis=1)                 # (B, M, F)
    wf = jnp.transpose(weights[..., None] * feat8, (0, 2, 1))     # (B, F, M)
    wf = wf.astype(jnp.float32)

    # Pad M to a multiple of 128 so lane-dense M tiles always exist.
    # Padded entries use idx = -1 (never matches any one-hot column) and wf = 0.
    Mp = ((M + 127) // 128) * 128
    pad = Mp - M
    idx_p = jnp.pad(flat_idx, ((0, 0), (0, pad)), constant_values=-1)
    wf_p = jnp.pad(wf, ((0, 0), (0, 0), (0, pad)))
    idx3 = idx_p.reshape(B, Mp, 1)

    # ---------------- kernel 1: rasterization scatter (MXU matmul) ----------------
    TM = _largest_tile(Mp, 128, 4096)
    onehot_budget = (8 << 20) if big_vmem else (4 << 20)
    tg_cap_bytes = max(128, (onehot_budget // (TM * 4)) // 128 * 128)
    tg_cap_steps = max(128, (G // 4) // 128 * 128)   # >= 4 parallel steps on G
    TG = _largest_tile(G, 128, min(tg_cap_bytes, tg_cap_steps))

    # rough per-step VMEM: double-buffered idx/wf/out + acc scratch + one-hot temp
    k1_est = (2 * (TM * 4) + 2 * (F * TM * 4) + 2 * (F * TG * 4)
              + F * TG * 4 + TM * TG * 4)
    k1_params = pltpu.CompilerParams(
        dimension_semantics=("parallel", "parallel", "arbitrary"),
        vmem_limit_bytes=int(min(max(2 * k1_est, 16 << 20), 40 << 20)))

    v_flat = pl.pallas_call(
        _raster_kernel,
        out_shape=jax.ShapeDtypeStruct((B, F, G), jnp.float32),
        grid=(B, G // TG, Mp // TM),
        in_specs=[
            pl.BlockSpec((1, TM, 1), lambda b, j, k: (b, k, 0)),
            pl.BlockSpec((1, F, TM), lambda b, j, k: (b, 0, k)),
        ],
        out_specs=pl.BlockSpec((1, F, TG), lambda b, j, k: (b, 0, j)),
        scratch_shapes=[pltpu.VMEM((F, TG), jnp.float32)],
        compiler_params=k1_params,
    )(idx3, wf_p)

    # TODO(synk): 3-D FFT/IFFT have no Pallas equivalent; kept as jnp.fft (XLA FFT).
    v = v_flat.reshape(B, F, rx, ry, rz)
    v_tilde = jnp.fft.fftn(v, axes=(2, 3, 4))
    # TODO(synk): the real/imag extraction + complex reassembly around kernel 2
    # materialize full-grid arrays; a bitcast-interleaved re/im layout would
    # remove ~2 HBM passes but needs in-kernel deinterleave (left as-is).
    vr = jnp.real(v_tilde).reshape(B, F, R, 128).astype(jnp.float32)
    vi = jnp.imag(v_tilde).reshape(B, F, R, 128).astype(jnp.float32)

    # ---------------- kernel 2: spectral Poisson filter ----------------
    max_rows = 2048 if big_vmem else 512
    if R >= 32 and R % 8 == 0:
        tr_cap = min(max_rows, max(8, (R // 4) // 8 * 8))   # >= 4 parallel steps
        TR = _largest_tile(R, 8, tr_cap)
    else:
        TR = R

    pow2 = all(_is_pow2(d) for d in grid)
    k2_est = (2 * 2 * F * TR * 128 * 4          # vr/vi double-buffered
              + 2 * 2 * TR * 128 * 4            # two outputs double-buffered
              + (0 if pow2 else 2 * 3 * TR * 128 * 4))
    k23_params = pltpu.CompilerParams(
        dimension_semantics=("parallel", "parallel"),
        vmem_limit_bytes=int(min(max(2 * k2_est, 16 << 20), 40 << 20)))

    out_shapes2 = (jax.ShapeDtypeStruct((B, R, 128), jnp.float32),
                   jax.ShapeDtypeStruct((B, R, 128), jnp.float32))
    out_specs2 = (pl.BlockSpec((1, TR, 128), lambda b, r: (b, r, 0)),
                  pl.BlockSpec((1, TR, 128), lambda b, r: (b, r, 0)))
    vrvi_spec = pl.BlockSpec((1, F, TR, 128), lambda b, r: (b, 0, r, 0))

    if pow2:
        # frequencies / Gaussian / Poisson scale rebuilt in-kernel (EUP + idle VALU)
        spectral = _make_spectral_pow2_kernel(grid, sigma, eps)
        chi_re, chi_im = pl.pallas_call(
            spectral,
            out_shape=out_shapes2,
            grid=(B, R // TR),
            in_specs=[vrvi_spec, vrvi_spec],
            out_specs=out_specs2,
            compiler_params=k23_params,
        )(vr, vi)
    else:
        # fallback: fold the scale into the frequencies once on the host
        u_flat = _fft_frequencies_flat(grid)                      # (3, G)
        usq = jnp.sum(u_flat ** 2, axis=0)
        gk = jnp.exp((-2.0 * (float(sigma) / float(rx)) ** 2) * usq)
        scale = gk / (2.0 * math.pi * (usq + eps))
        us = (u_flat * scale[None, :]).reshape(3, R, 128).astype(jnp.float32)
        chi_re, chi_im = pl.pallas_call(
            _spectral_kernel_hbm,
            out_shape=out_shapes2,
            grid=(B, R // TR),
            in_specs=[vrvi_spec, vrvi_spec,
                      pl.BlockSpec((3, TR, 128), lambda b, r: (0, r, 0))],
            out_specs=out_specs2,
            compiler_params=k23_params,
        )(vr, vi, us)

    chi_tilde = (chi_re + 1j * chi_im).reshape(B, rx, ry, rz)
    chi_prime = jnp.real(jnp.fft.ifftn(chi_tilde, axes=(1, 2, 3))).astype(jnp.float32)
    chi_flat = chi_prime.reshape(B, G)

    # O(M) per-batch mean of the interpolated field + origin scale, in plain JAX
    # (no O(M*G) one-hot gather inside a kernel).
    gathered = jnp.take_along_axis(chi_flat, flat_idx, axis=1)    # (B, M)
    chi_c = jnp.sum((weights * gathered).reshape(B, N, 2 ** dim), axis=-1)
    mean = jnp.mean(chi_c, axis=-1)                               # (B,)
    scale0 = 0.5 / jnp.abs(chi_flat[:, 0] - mean)                 # (B,)
    sc = jnp.stack([mean, scale0], axis=1).astype(jnp.float32)    # (B, 2)

    # ---------------- kernel 3: normalization (per-batch SMEM scalars) ----------------
    chi = pl.pallas_call(
        _normalize_kernel,
        out_shape=jax.ShapeDtypeStruct((B, R, 128), jnp.float32),
        grid_spec=pltpu.PrefetchScalarGridSpec(
            num_scalar_prefetch=1,
            grid=(B, R // TR),
            in_specs=[pl.BlockSpec((1, TR, 128), lambda b, r, sc: (b, r, 0))],
            out_specs=pl.BlockSpec((1, TR, 128), lambda b, r, sc: (b, r, 0)),
        ),
        compiler_params=k23_params,
    )(sc, chi_flat.reshape(B, R, 128))

    return chi.reshape(B, rx, ry, rz)


# ----------------------------------------------------------------------------
# Pure-JAX reference (mirrors the PyTorch module, B = 1 semantics)
# ----------------------------------------------------------------------------

def dpsr_reference(points, normals, grid=(16, 16, 16), sigma=2, eps=1e-6):
    B, N, dim = points.shape
    F = normals.shape[2]
    rx, ry, rz = grid
    G = rx * ry * rz
    flat_idx, weights = _trilinear_setup(points, grid)            # (B, M), (B, M)

    feat8 = jnp.repeat(normals, 2 ** dim, axis=1)                 # (B, M, F)
    vals = weights[..., None] * feat8                             # (B, M, F)
    v = jnp.zeros((B, F, G), jnp.float32)
    b_idx = jnp.arange(B)[:, None, None]
    f_idx = jnp.arange(F)[None, None, :]
    v = v.at[b_idx, f_idx, flat_idx[:, :, None]].add(vals)
    v = v.reshape(B, F, rx, ry, rz)

    v_tilde = jnp.fft.fftn(v, axes=(2, 3, 4))
    vt = jnp.transpose(v_tilde, (0, 2, 3, 4, 1))                  # (B, rx, ry, rz, F)
    u_flat = _fft_frequencies_flat(grid)                          # (3, G)
    u = jnp.transpose(u_flat, (1, 0)).reshape(1, rx, ry, rz, 3)
    usq = jnp.sum(u ** 2, axis=-1)
    g = jnp.exp(-2.0 * (sigma / grid[0]) ** 2 * usq)
    num = jnp.sum(u * vt, axis=-1)
    chi_tilde = g * ((-1j / (2.0 * jnp.pi)) * num / (usq + eps))
    chi_prime = jnp.real(jnp.fft.ifftn(chi_tilde, axes=(1, 2, 3))).astype(jnp.float32)

    chi_flat = chi_prime.reshape(B, G)
    gathered = jnp.take_along_axis(chi_flat, flat_idx, axis=1)    # (B, M)
    chi_c = jnp.sum((weights * gathered).reshape(B, N, 2 ** dim), axis=-1)
    mean = jnp.mean(chi_c, axis=-1)                               # (B,)
    vec = chi_prime - mean[:, None, None, None]
    chi0 = vec[:, 0, 0, 0]
    return (0.5 / jnp.abs(chi0))[:, None, None, None] * vec


# ----------------------------------------------------------------------------

if __name__ == "__main__":
    key = jax.random.PRNGKey(0)
    B, N = 1, 16
    grid = (16, 16, 16)
    sigma = 2

    kp, kn = jax.random.split(key)
    points = jax.random.uniform(kp, (B, N, 3), jnp.float32, minval=0.05, maxval=0.95)
    normals = jax.random.normal(kn, (B, N, 3), jnp.float32)
    normals = normals / jnp.linalg.norm(normals, axis=-1, keepdims=True)

    chi = dpsr_forward(points, normals, grid=grid, sigma=sigma)
    chi = jax.block_until_ready(chi)

    chi_ref = dpsr_reference(points, normals, grid=grid, sigma=sigma)
    rel = jnp.linalg.norm(chi - chi_ref) / (jnp.linalg.norm(chi_ref) + 1e-12)

    assert chi.shape == (B,) + grid
    assert bool(jnp.all(jnp.isfinite(chi)))
    assert float(rel) < 1e-3, f"relative error too large: {float(rel)}"
    print("KERNEL_OK")
</pallas_src>

<mosaic_0001>
module attributes {stable_mosaic.version = 11 : i64} {
  func.func @_raster_kernel(%arg0: i32, %arg1: i32, %arg2: i32, %arg3: memref<1x128x1xi32, #tpu.memory_space<vmem>>, %arg4: memref<1x3x128xf32, #tpu.memory_space<vmem>>, %arg5: memref<1x3x1024xf32, #tpu.memory_space<vmem>>, %arg6: memref<3x1024xf32, #tpu.memory_space<vmem>>) attributes {dimension_semantics = [#tpu.dimension_semantics<parallel>, #tpu.dimension_semantics<parallel>, #tpu.dimension_semantics<arbitrary>], iteration_bounds = array<i64: 1, 4, 1>, scalar_prefetch = 0 : i64, scratch_operands = 1 : i64, tpu.core_type = #tpu.core_type<tc>, window_params = [{transform_indices = @transform_0, window_bounds = array<i64: 1, 128, 1>}, {transform_indices = @transform_1, window_bounds = array<i64: 1, 3, 128>}, {transform_indices = @transform_2, window_bounds = array<i64: 1, 3, 1024>}]} {
    %c0_i32 = arith.constant 0 : i32
    %0 = arith.cmpi eq, %arg2, %c0_i32 : i32
    %1 = arith.extui %0 : i1 to i32
    %c0_i32_0 = arith.constant 0 : i32
    %2 = arith.cmpi ne, %1, %c0_i32_0 : i32
    scf.if %2 {
      %cst_12 = arith.constant 0.000000e+00 : f32
      %22 = vector.broadcast %cst_12 : f32 to vector<3x1024xf32>
      %c0_13 = arith.constant 0 : index
      %c0_14 = arith.constant 0 : index
      %23 = vector.load %arg6[%c0_13, %c0_14] : memref<3x1024xf32, #tpu.memory_space<vmem>>, vector<3x1024xf32>
      tpu.vector_store %arg6[%c0_13, %c0_14], %22 {strides = array<i32>} : memref<3x1024xf32, #tpu.memory_space<vmem>>, vector<3x1024xf32>,
    } else {
    }
    %c0 = arith.constant 0 : index
    %c0_1 = arith.constant 0 : index
    %c0_2 = arith.constant 0 : index
    %3 = vector.load %arg3[%c0, %c0_1, %c0_2] : memref<1x128x1xi32, #tpu.memory_space<vmem>>, vector<1x128x1xi32>
    %4 = vector.shape_cast %3 : vector<1x128x1xi32> to vector<128x1xi32>
    %c1024_i32 = arith.constant 1024 : i32
    %5 = arith.muli %arg1, %c1024_i32 : i32
    %6 = vector.broadcast %5 : i32 to vector<128x1xi32>
    %7 = arith.subi %4, %6 : vector<128x1xi32>
    %8 = tpu.iota {dimensions = array<i32: 1>} : vector<128x1024xi32>
    %9 = vector.broadcast %7 : vector<128x1xi32> to vector<128x1024xi32>
    %10 = arith.cmpi eq, %9, %8 : vector<128x1024xi32>
    %11 = arith.extui %10 : vector<128x1024xi1> to vector<128x1024xi32>
    %12 = arith.sitofp %11 : vector<128x1024xi32> to vector<128x1024xf32>
    %c0_3 = arith.constant 0 : index
    %c0_4 = arith.constant 0 : index
    %13 = vector.load %arg6[%c0_3, %c0_4] : memref<3x1024xf32, #tpu.memory_space<vmem>>, vector<3x1024xf32>
    %c0_5 = arith.constant 0 : index
    %c0_6 = arith.constant 0 : index
    %c0_7 = arith.constant 0 : index
    %14 = vector.load %arg4[%c0_5, %c0_6, %c0_7] : memref<1x3x128xf32, #tpu.memory_space<vmem>>, vector<1x3x128xf32>
    %15 = vector.shape_cast %14 : vector<1x3x128xf32> to vector<3x128xf32>
    %cst = arith.constant dense<0.000000e+00> : vector<3x1024xf32>
    %16 = tpu.matmul %15, %12, %cst {dimension_numbers = #tpu.dot_dimension_numbers<[1], [0], [0], [1], [0, 0, 1, 1], [], []>} : vector<3x128xf32>, vector<128x1024xf32>, vector<3x1024xf32> -> vector<3x1024xf32>
    %17 = arith.addf %13, %16 : vector<3x1024xf32>
    %c0_8 = arith.constant 0 : index
    %c0_9 = arith.constant 0 : index
    %18 = vector.load %arg6[%c0_8, %c0_9] : memref<3x1024xf32, #tpu.memory_space<vmem>>, vector<3x1024xf32>
    tpu.vector_store %arg6[%c0_8, %c0_9], %17 {strides = array<i32>} : memref<3x1024xf32, #tpu.memory_space<vmem>>, vector<3x1024xf32>,
    %c0_i32_10 = arith.constant 0 : i32
    %19 = arith.cmpi eq, %arg2, %c0_i32_10 : i32
    %20 = arith.extui %19 : i1 to i32
    %c0_i32_11 = arith.constant 0 : i32
    %21 = arith.cmpi ne, %20, %c0_i32_11 : i32
    scf.if %21 {
      %c0_12 = arith.constant 0 : index
      %c0_13 = arith.constant 0 : index
      %22 = vector.load %arg6[%c0_12, %c0_13] : memref<3x1024xf32, #tpu.memory_space<vmem>>, vector<3x1024xf32>
      %c0_14 = arith.constant 0 : index
      %c0_15 = arith.constant 0 : index
      %c0_16 = arith.constant 0 : index
      %23 = vector.load %arg5[%c0_14, %c0_15, %c0_16] : memref<1x3x1024xf32, #tpu.memory_space<vmem>>, vector<1x3x1024xf32>
      %24 = vector.shape_cast %23 : vector<1x3x1024xf32> to vector<3x1024xf32>
      %25 = vector.shape_cast %22 : vector<3x1024xf32> to vector<1x3x1024xf32>
      tpu.vector_store %arg5[%c0_14, %c0_15, %c0_16], %25 {strides = array<i32>} : memref<1x3x1024xf32, #tpu.memory_space<vmem>>, vector<1x3x1024xf32>,
    } else {
    }
    return
  }
  func.func @transform_0(%arg0: i32, %arg1: i32, %arg2: i32) -> (i32, i32, i32) {
    %c0_i32 = arith.constant 0 : i32
    %c0_i32_0 = arith.constant 0 : i32
    return %arg0, %arg2, %c0_i32 : i32, i32, i32
  }
  func.func @transform_1(%arg0: i32, %arg1: i32, %arg2: i32) -> (i32, i32, i32) {
    %c0_i32 = arith.constant 0 : i32
    %c0_i32_0 = arith.constant 0 : i32
    return %arg0, %c0_i32, %arg2 : i32, i32, i32
  }
  func.func @transform_2(%arg0: i32, %arg1: i32, %arg2: i32) -> (i32, i32, i32) {
    %c0_i32 = arith.constant 0 : i32
    %c0_i32_0 = arith.constant 0 : i32
    return %arg0, %c0_i32, %arg1 : i32, i32, i32
  }
}

</mosaic_0001>

<llo_original>
// kernel: tpu_custom_call.1
$region0: #{tpu_custom_call.1}
  #allocation0 [shape = 'u32[]', space=smem, size = 0x4, offset = 0x4, fixed_abs, tag = 'smem constant byte address 0x4 - core index']
  #allocation1 [shape = 'u32[144,128]{1,0:T(1,128)}', space=vmem, size = 0x12000, scoped, tag = 'internal scratch']
  #allocation2 [shape = 'f32[3,1024]{1,0:T(4,128)}', space=vmem, size = 0x4000, scoped, tag = 'scratch operand']
  %s0 = inlined_call_operand.vmem [shape: s32[1,128,1], index: 0, kind: input, shape index: {}]
  %s1 = inlined_call_operand.vmem [shape: f32[1,3,128], index: 1, kind: input, shape index: {}]
  %s2 = inlined_call_operand.vmem [shape: f32[1,3,4096], index: 2, kind: output, shape index: {}]
  %s3 = sld [smem:[#allocation0]]
  $region49: #{tpu_custom_call.1} parent=0
    _
  %s5 = ssub.s32 1, %s3
  %s6 = scalar_select 0, %s5, %s3
  loop: start=0, step=1, limit=6
  $region2: #{tpu_custom_call.1} parent=0 // loop_pre_header
    _
  $region3: #{tpu_custom_call.1} parent=0 // loop_header
    %s8 = sphi 0, %s12
    %p9 = scmp.ge.s32.totalorder %s8, 6
    %s15 = sphi 0, %s34
    %s16 = sphi 0, %s30
    %s17 = sphi 0, %s26
    %s18 = sphi 0, %s15
    %s19 = sphi 0, %s16
    %s20 = sphi 0, %s17
    %s21 = sphi 0, %s18
    %s22 = sphi 0, %s19
    %s23 = sphi 0, %s20
    %s39 = sphi 0, %s41
    %s42 = sphi 0, %s39
    %s43 = sphi 0, %s42
    %s59 = sphi 0, %s43
    %s67 = sphi 0, %s69
    %s70 = sphi 0, %s67
    %s71 = sphi 0, %s70
    %s87 = sphi 0, %s71
    %s95 = sphi 0, %s97
    %s98 = sphi 0, %s95
    %s99 = sphi 0, %s98
    %s115 = sphi 0, %s99
  $region4: #{tpu_custom_call.1} parent=0 // loop_header_branch
    %11 = sbr.rel (%p9) target = $region8
  $region5: #{tpu_custom_call.1} parent=0 // loop_body
    %s13 = ssub.s32 %s8, 1
    %s14 = ssub.s32 %s8, 2
    %s24 = sadd.s32 1, %s17
    %p25 = scmp.ge.s32.totalorder %s24, 1
    %s26 = scalar_select %p25, 0, %s24
    %s27 = sadd.s32 1, %s16
    %s28 = scalar_select %p25, %s27, %s16
    %p29 = scmp.ge.s32.totalorder %s28, 4
    %s30 = scalar_select %p29, 0, %s28
    %s31 = sadd.s32 1, %s15
    %s32 = scalar_select %p29, %s31, %s15
    %p33 = scmp.ge.s32.totalorder %s32, 1
    %s34 = scalar_select %p33, 0, %s32
    %s35 = ssub.s32 %s15, %s34
    %s36 = ssub.s32 %s17, %s26
    %s37 = sor.u32 %s35, %s36
    %p38 = scmp.eq.s32.totalorder %s37, 0
    %s40 = sadd.s32 %s39, 1
    %s41 = scalar_select %p38, %s39, %s40
    %p44 = pneg %p38
    %p45 = scmp.eq.s32.totalorder %s8, 3
    %p46 = por %p44, %p45
    %p47 = scmp.ne.s32.totalorder %s39, %s42
    %p48 = scmp.eq.s32.totalorder %s8, 0
    %p49 = por %p47, %p48
    %p50 = scmp.ne.s32.totalorder %s39, %s42
    %p51 = scmp.eq.s32.totalorder %s13, 3
    %p52 = por %p50, %p51
    %p53 = scmp.ne.s32.totalorder %s42, %s43
    %p54 = scmp.eq.s32.totalorder %s13, 0
    %p55 = por %p53, %p54
    %p56 = scmp.ne.s32.totalorder %s42, %s43
    %p57 = scmp.eq.s32.totalorder %s14, 3
    %p58 = por %p56, %p57
    %p60 = scmp.ne.s32.totalorder %s43, %s59
    %p61 = scmp.eq.s32.totalorder %s14, 0
    %p62 = por %p60, %p61
    %s63 = ssub.s32 %s15, %s34
    %s64 = ssub.s32 %s17, %s26
    %s65 = sor.u32 %s63, %s64
    %p66 = scmp.eq.s32.totalorder %s65, 0
    %s68 = sadd.s32 %s67, 1
    %s69 = scalar_select %p66, %s67, %s68
    %p72 = pneg %p66
    %p73 = scmp.eq.s32.totalorder %s8, 3
    %p74 = por %p72, %p73
    %p75 = scmp.ne.s32.totalorder %s67, %s70
    %p76 = scmp.eq.s32.totalorder %s8, 0
    %p77 = por %p75, %p76
    %p78 = scmp.ne.s32.totalorder %s67, %s70
    %p79 = scmp.eq.s32.totalorder %s13, 3
    %p80 = por %p78, %p79
    %p81 = scmp.ne.s32.totalorder %s70, %s71
    %p82 = scmp.eq.s32.totalorder %s13, 0
    %p83 = por %p81, %p82
    %p84 = scmp.ne.s32.totalorder %s70, %s71
    %p85 = scmp.eq.s32.totalorder %s14, 3
    %p86 = por %p84, %p85
    %p88 = scmp.ne.s32.totalorder %s71, %s87
    %p89 = scmp.eq.s32.totalorder %s14, 0
    %p90 = por %p88, %p89
    %s91 = ssub.s32 %s15, %s34
    %s92 = ssub.s32 %s16, %s30
    %s93 = sor.u32 %s91, %s92
    %p94 = scmp.eq.s32.totalorder %s93, 0
    %s96 = sadd.s32 %s95, 1
    %s97 = scalar_select %p94, %s95, %s96
    %p100 = pneg %p94
    %p101 = scmp.eq.s32.totalorder %s8, 3
    %p102 = por %p100, %p101
    %p103 = scmp.ne.s32.totalorder %s95, %s98
    %p104 = scmp.eq.s32.totalorder %s8, 0
    %p105 = por %p103, %p104
    %p106 = scmp.ne.s32.totalorder %s95, %s98
    %p107 = scmp.eq.s32.totalorder %s13, 3
    %p108 = por %p106, %p107
    %p109 = scmp.ne.s32.totalorder %s98, %s99
    %p110 = scmp.eq.s32.totalorder %s13, 0
    %p111 = por %p109, %p110
    %p112 = scmp.ne.s32.totalorder %s98, %s99
    %p113 = scmp.eq.s32.totalorder %s14, 3
    %p114 = por %p112, %p113
    %p116 = scmp.ne.s32.totalorder %s99, %s115
    %p117 = scmp.eq.s32.totalorder %s14, 0
    %p118 = por %p116, %p117
    %p119 = scmp.le.s32.totalorder 1, %s8
    %p120 = scmp.lt.s32.totalorder %s8, 5
    %p121 = pnand %p119, %p120
    %p122 = pneg %p121
    // Predicated region
    $region9: #{tpu_custom_call.1} parent=5 // pred_check
      _
    $region10: #{tpu_custom_call.1} parent=5 // pred_check_branch
      %124 = sbr.rel (%p121) target = $region12
    $region11: #{tpu_custom_call.1} parent=5 // pred_region
      %s125 = ssub.s32 %s8, 1
      // Predicated region
      $region13: #{tpu_custom_call.1} parent=11 // pred_check
        %p126 = pneg %p55
      $region14: #{tpu_custom_call.1} parent=11 // pred_check_branch
        %128 = sbr.rel (%p126) target = $region16
      $region15: #{tpu_custom_call.1} parent=11 // pred_region
        %s129 = smul.u32 16, %s20
        %p130 = scmp.lt.s32.totalorder %s18, 0
        %s131 = scalar_select %p130, %s18, 0
        %p132 = scmp.lt.s32.totalorder %s129, 15
        %s133 = scalar_select %p132, %s129, 15
        %s134 = smul.addr %s131, 16
        %s135 = sadd.s32 %s133, %s134
        %s136 = smul.addr %s135, 8
        %s137 = scalar_lea.vmem %s0, %s136
        %s138 = smul.u32 16, %s20
      $region16: #{tpu_custom_call.1} parent=11 // pred_fallthru
        _
      // Predicated region
      $region17: #{tpu_custom_call.1} parent=11 // pred_check
        %p139 = pneg %p83
      $region18: #{tpu_custom_call.1} parent=11 // pred_check_branch
        %141 = sbr.rel (%p139) target = $region20
      $region19: #{tpu_custom_call.1} parent=11 // pred_region
        %p142 = scmp.lt.s32.totalorder %s18, 0
        %s143 = scalar_select %p142, %s18, 0
        %p144 = scmp.lt.s32.totalorder %s20, 0
        %s145 = scalar_select %p144, %s20, 0
        %s146 = sadd.s32 %s145, %s143
        %s147 = smul.addr %s146, 4
        %s148 = scalar_lea.vmem %s1, %s147
      $region20: #{tpu_custom_call.1} parent=11 // pred_fallthru
        _
    $region12: #{tpu_custom_call.1} parent=5 // pred_fallthru
      _
    %p149 = scmp.lt.s32.totalorder %s8, 4
    // Predicated region
    $region21: #{tpu_custom_call.1} parent=5 // pred_check
      %p150 = pneg %p149
    $region22: #{tpu_custom_call.1} parent=5 // pred_check_branch
      %152 = sbr.rel (%p150) target = $region24
    $region23: #{tpu_custom_call.1} parent=5 // pred_region
      _
    $region24: #{tpu_custom_call.1} parent=5 // pred_fallthru
      _
    %p153 = scmp.le.s32.totalorder 1, %s8
    %p154 = scmp.lt.s32.totalorder %s8, 5
    %p155 = pnand %p153, %p154
    %p156 = pneg %p155
    // Predicated region
    $region25: #{tpu_custom_call.1} parent=5 // pred_check
      _
    $region26: #{tpu_custom_call.1} parent=5 // pred_check_branch
      %158 = sbr.rel (%p155) target = $region28
    $region27: #{tpu_custom_call.1} parent=5 // pred_region
      %s159 = ssub.s32 %s8, 1
      %s160 = smul.u32 16, %s20
      %p161 = scmp.lt.s32.totalorder %s18, 0
      %s162 = scalar_select %p161, %s18, 0
      %p163 = scmp.lt.s32.totalorder %s160, 15
      %s164 = scalar_select %p163, %s160, 15
      %s165 = smul.addr %s162, 16
      %s166 = sadd.s32 %s164, %s165
      %s167 = smul.addr %s166, 8
      %s168 = scalar_lea.vmem %s0, %s167
      %p169 = pneg %p55
      %p170 = pneg %p52
      %p171 = scmp.lt.s32.totalorder %s18, 0
      %s172 = scalar_select %p171, %s18, 0
      %p173 = scmp.lt.s32.totalorder %s20, 0
      %s174 = scalar_select %p173, %s20, 0
      %s175 = sadd.s32 %s174, %s172
      %s176 = smul.addr %s175, 4
      %s177 = scalar_lea.vmem %s1, %s176
      %p178 = pneg %p83
      %p179 = pneg %p80
      %p180 = pneg %p111
      %p181 = pneg %p108
      %s182 = smul.u32 8, %s19
      %p183 = scmp.lt.s32.totalorder %s18, 0
      %s184 = scalar_select %p183, %s18, 0
      %p185 = scmp.lt.s32.totalorder %s182, 31
      %s186 = scalar_select %p185, %s182, 31
      %s187 = smul.addr %s184, 32
      %s188 = sadd.s32 %s186, %s187
      %s189 = smul.addr %s188, 4
      %s190 = scalar_lea.vmem %s2, %s189
      %s191 = smul.u32 16, %s20
      %p192 = scmp.lt.s32.totalorder %s18, 0
      %s193 = scalar_select %p192, %s18, 0
      %p194 = scmp.lt.s32.totalorder %s191, 15
      %s195 = scalar_select %p194, %s191, 15
      %s196 = smul.addr %s193, 16
      %s197 = sadd.s32 %s195, %s196
      %s198 = smul.addr %s197, 8
      %s199 = scalar_lea.vmem %s0, %s198
      %s200 = smul.u32 16, %s20
      %p201 = scmp.lt.s32.totalorder %s18, 0
      %s202 = scalar_select %p201, %s18, 0
      %p203 = scmp.lt.s32.totalorder %s20, 0
      %s204 = scalar_select %p203, %s20, 0
      %s205 = sadd.s32 %s204, %s202
      %s206 = smul.addr %s205, 4
      %s207 = scalar_lea.vmem %s1, %s206
      %s208 = smul.u32 8, %s19
      %p209 = scmp.lt.s32.totalorder %s18, 0
      %s210 = scalar_select %p209, %s18, 0
      %p211 = scmp.lt.s32.totalorder %s208, 31
      %s212 = scalar_select %p211, %s208, 31
      %s213 = smul.addr %s210, 32
      %s214 = sadd.s32 %s212, %s213
      %s215 = smul.addr %s214, 4
      %s216 = scalar_lea.vmem %s2, %s215
      %s217 = smul.u32 8, %s19
      %p218 = scmp.eq.s32.totalorder %s20, 0
      // Predicated region
      $region29: #{tpu_custom_call.1} parent=27 // pred_check
        %p219 = pneg %p218
      $region30: #{tpu_custom_call.1} parent=27 // pred_check_branch
        %221 = sbr.rel (%p219) target = $region32
      $region31: #{tpu_custom_call.1} parent=27 // pred_region
        %222 = vst [vmem:[#allocation2] sm:$0x77] 0.0
        %223 = vst [vmem:[#allocation2 + $0x8] sm:$0x77] 0.0
        %224 = vst [vmem:[#allocation2 + $0x10] sm:$0x77] 0.0
        %225 = vst [vmem:[#allocation2 + $0x18] sm:$0x77] 0.0
      $region32: #{tpu_custom_call.1} parent=27 // pred_fallthru
        _
      %v226 = vld [vmem:[%s199] sm:$0xff]
      %v227 = vld [vmem:[%s199 + $0x8] sm:$0xff]
      %v228 = vld [vmem:[%s199 + $0x10] sm:$0xff]
      %v229 = vld [vmem:[%s199 + $0x18] sm:$0xff]
      %v230 = vld [vmem:[%s199 + $0x20] sm:$0xff]
      %v231 = vld [vmem:[%s199 + $0x28] sm:$0xff]
      %v232 = vld [vmem:[%s199 + $0x30] sm:$0xff]
      %v233 = vld [vmem:[%s199 + $0x38] sm:$0xff]
      %v234 = vld [vmem:[%s199 + $0x40] sm:$0xff]
      %v235 = vld [vmem:[%s199 + $0x48] sm:$0xff]
      %v236 = vld [vmem:[%s199 + $0x50] sm:$0xff]
      %v237 = vld [vmem:[%s199 + $0x58] sm:$0xff]
      %v238 = vld [vmem:[%s199 + $0x60] sm:$0xff]
      %v239 = vld [vmem:[%s199 + $0x68] sm:$0xff]
      %v240 = vld [vmem:[%s199 + $0x70] sm:$0xff]
      %v241 = vld [vmem:[%s199 + $0x78] sm:$0xff]
      %s242 = smul.u32 %s19, 1024
      %v243 = vstv %s242
      %v244 = vsub.s32 %v226, %v243
      %v245 = vsub.s32 %v227, %v243
      %v246 = vsub.s32 %v228, %v243
      %v247 = vsub.s32 %v229, %v243
      %v248 = vsub.s32 %v230, %v243
      %v249 = vsub.s32 %v231, %v243
      %v250 = vsub.s32 %v232, %v243
      %v251 = vsub.s32 %v233, %v243
      %v252 = vsub.s32 %v234, %v243
      %v253 = vsub.s32 %v235, %v243
      %v254 = vsub.s32 %v236, %v243
      %v255 = vsub.s32 %v237, %v243
      %v256 = vsub.s32 %v238, %v243
      %v257 = vsub.s32 %v239, %v243
      %v258 = vsub.s32 %v240, %v243
      %v259 = vsub.s32 %v241, %v243
      %v260 = vlaneseq
      %v261 = vand.u32 %v260, 127
      %v262 = vadd.s32 %v261, 128
      %v263 = vadd.s32 %v261, 256
      %v264 = vadd.s32 %v261, 384
      %v265 = vadd.s32 %v261, 512
      %v266 = vadd.s32 %v261, 640
      %v267 = vadd.s32 %v261, 768
      %v268 = vadd.s32 %v261, 896
      %269 = vset.pattern.permute.xlu0 0
      %270 = vperm.xlu0 %269, %v244
      %v271 = vpop.permute.xlu0 %270
      %272 = vset.pattern.permute.xlu0 0
      %273 = vperm.xlu0 %272, %v245
      %v274 = vpop.permute.xlu0 %273
      %275 = vset.pattern.permute.xlu0 0
      %276 = vperm.xlu0 %275, %v246
      %v277 = vpop.permute.xlu0 %276
      %278 = vset.pattern.permute.xlu0 0
      %279 = vperm.xlu0 %278, %v247
      %v280 = vpop.permute.xlu0 %279
      %281 = vset.pattern.permute.xlu0 0
      %282 = vperm.xlu0 %281, %v248
      %v283 = vpop.permute.xlu0 %282
      %284 = vset.pattern.permute.xlu0 0
      %285 = vperm.xlu0 %284, %v249
      %v286 = vpop.permute.xlu0 %285
      %287 = vset.pattern.permute.xlu0 0
      %288 = vperm.xlu0 %287, %v250
      %v289 = vpop.permute.xlu0 %288
      %290 = vset.pattern.permute.xlu0 0
      %291 = vperm.xlu0 %290, %v251
      %v292 = vpop.permute.xlu0 %291
      %293 = vset.pattern.permute.xlu0 0
      %294 = vperm.xlu0 %293, %v252
      %v295 = vpop.permute.xlu0 %294
      %296 = vset.pattern.permute.xlu0 0
      %297 = vperm.xlu0 %296, %v253
      %v298 = vpop.permute.xlu0 %297
      %299 = vset.pattern.permute.xlu0 0
      %300 = vperm.xlu0 %299, %v254
      %v301 = vpop.permute.xlu0 %300
      %302 = vset.pattern.permute.xlu0 0
      %303 = vperm.xlu0 %302, %v255
      %v304 = vpop.permute.xlu0 %303
      %305 = vset.pattern.permute.xlu0 0
      %306 = vperm.xlu0 %305, %v256
      %v307 = vpop.permute.xlu0 %306
      %308 = vset.pattern.permute.xlu0 0
      %309 = vperm.xlu0 %308, %v257
      %v310 = vpop.permute.xlu0 %309
      %311 = vset.pattern.permute.xlu0 0
      %312 = vperm.xlu0 %311, %v258
      %v313 = vpop.permute.xlu0 %312
      %314 = vset.pattern.permute.xlu0 0
      %315 = vperm.xlu0 %314, %v259
      %v316 = vpop.permute.xlu0 %315
      %vm317 = vcmp.eq.s32.totalorder %v271, %v261
      %vm318 = vcmp.eq.s32.totalorder %v271, %v262
      %vm319 = vcmp.eq.s32.totalorder %v271, %v263
      %vm320 = vcmp.eq.s32.totalorder %v271, %v264
      %vm321 = vcmp.eq.s32.totalorder %v271, %v265
      %vm322 = vcmp.eq.s32.totalorder %v271, %v266
      %vm323 = vcmp.eq.s32.totalorder %v271, %v267
      %vm324 = vcmp.eq.s32.totalorder %v271, %v268
      %vm325 = vcmp.eq.s32.totalorder %v274, %v261
      %vm326 = vcmp.eq.s32.totalorder %v274, %v262
      %vm327 = vcmp.eq.s32.totalorder %v274, %v263
      %vm328 = vcmp.eq.s32.totalorder %v274, %v264
      %vm329 = vcmp.eq.s32.totalorder %v274, %v265
      %vm330 = vcmp.eq.s32.totalorder %v274, %v266
      %vm331 = vcmp.eq.s32.totalorder %v274, %v267
      %vm332 = vcmp.eq.s32.totalorder %v274, %v268
      %vm333 = vcmp.eq.s32.totalorder %v277, %v261
      %vm334 = vcmp.eq.s32.totalorder %v277, %v262
      %vm335 = vcmp.eq.s32.totalorder %v277, %v263
      %vm336 = vcmp.eq.s32.totalorder %v277, %v264
      %vm337 = vcmp.eq.s32.totalorder %v277, %v265
      %vm338 = vcmp.eq.s32.totalorder %v277, %v266
      %vm339 = vcmp.eq.s32.totalorder %v277, %v267
      %vm340 = vcmp.eq.s32.totalorder %v277, %v268
      %vm341 = vcmp.eq.s32.totalorder %v280, %v261
      %vm342 = vcmp.eq.s32.totalorder %v280, %v262
      %vm343 = vcmp.eq.s32.totalorder %v280, %v263
      %vm344 = vcmp.eq.s32.totalorder %v280, %v264
      %vm345 = vcmp.eq.s32.totalorder %v280, %v265
      %vm346 = vcmp.eq.s32.totalorder %v280, %v266
      %vm347 = vcmp.eq.s32.totalorder %v280, %v267
      %vm348 = vcmp.eq.s32.totalorder %v280, %v268
      %vm349 = vcmp.eq.s32.totalorder %v283, %v261
      %vm350 = vcmp.eq.s32.totalorder %v283, %v262
      %vm351 = vcmp.eq.s32.totalorder %v283, %v263
      %vm352 = vcmp.eq.s32.totalorder %v283, %v264
      %vm353 = vcmp.eq.s32.totalorder %v283, %v265
      %vm354 = vcmp.eq.s32.totalorder %v283, %v266
      %vm355 = vcmp.eq.s32.totalorder %v283, %v267
      %vm356 = vcmp.eq.s32.totalorder %v283, %v268
      %vm357 = vcmp.eq.s32.totalorder %v286, %v261
      %vm358 = vcmp.eq.s32.totalorder %v286, %v262
      %vm359 = vcmp.eq.s32.totalorder %v286, %v263
      %vm360 = vcmp.eq.s32.totalorder %v286, %v264
      %vm361 = vcmp.eq.s32.totalorder %v286, %v265
      %vm362 = vcmp.eq.s32.totalorder %v286, %v266
      %vm363 = vcmp.eq.s32.totalorder %v286, %v267
      %vm364 = vcmp.eq.s32.totalorder %v286, %v268
      %vm365 = vcmp.eq.s32.totalorder %v289, %v261
      %vm366 = vcmp.eq.s32.totalorder %v289, %v262
      %vm367 = vcmp.eq.s32.totalorder %v289, %v263
      %vm368 = vcmp.eq.s32.totalorder %v289, %v264
      %vm369 = vcmp.eq.s32.totalorder %v289, %v265
      %vm370 = vcmp.eq.s32.totalorder %v289, %v266
      %vm371 = vcmp.eq.s32.totalorder %v289, %v267
      %vm372 = vcmp.eq.s32.totalorder %v289, %v268
      %vm373 = vcmp.eq.s32.totalorder %v292, %v261
      %vm374 = vcmp.eq.s32.totalorder %v292, %v262
      %vm375 = vcmp.eq.s32.totalorder %v292, %v263
      %vm376 = vcmp.eq.s32.totalorder %v292, %v264
      %vm377 = vcmp.eq.s32.totalorder %v292, %v265
      %vm378 = vcmp.eq.s32.totalorder %v292, %v266
      %vm379 = vcmp.eq.s32.totalorder %v292, %v267
      %vm380 = vcmp.eq.s32.totalorder %v292, %v268
      %vm381 = vcmp.eq.s32.totalorder %v295, %v261
      %vm382 = vcmp.eq.s32.totalorder %v295, %v262
      %vm383 = vcmp.eq.s32.totalorder %v295, %v263
      %vm384 = vcmp.eq.s32.totalorder %v295, %v264
      %vm385 = vcmp.eq.s32.totalorder %v295, %v265
      %vm386 = vcmp.eq.s32.totalorder %v295, %v266
      %vm387 = vcmp.eq.s32.totalorder %v295, %v267
      %vm388 = vcmp.eq.s32.totalorder %v295, %v268
      %vm389 = vcmp.eq.s32.totalorder %v298, %v261
      %vm390 = vcmp.eq.s32.totalorder %v298, %v262
      %vm391 = vcmp.eq.s32.totalorder %v298, %v263
      %vm392 = vcmp.eq.s32.totalorder %v298, %v264
      %vm393 = vcmp.eq.s32.totalorder %v298, %v265
      %vm394 = vcmp.eq.s32.totalorder %v298, %v266
      %vm395 = vcmp.eq.s32.totalorder %v298, %v267
      %vm396 = vcmp.eq.s32.totalorder %v298, %v268
      %vm397 = vcmp.eq.s32.totalorder %v301, %v261
      %vm398 = vcmp.eq.s32.totalorder %v301, %v262
      %vm399 = vcmp.eq.s32.totalorder %v301, %v263
      %vm400 = vcmp.eq.s32.totalorder %v301, %v264
      %vm401 = vcmp.eq.s32.totalorder %v301, %v265
      %vm402 = vcmp.eq.s32.totalorder %v301, %v266
      %vm403 = vcmp.eq.s32.totalorder %v301, %v267
      %vm404 = vcmp.eq.s32.totalorder %v301, %v268
      %vm405 = vcmp.eq.s32.totalorder %v304, %v261
      %vm406 = vcmp.eq.s32.totalorder %v304, %v262
      %vm407 = vcmp.eq.s32.totalorder %v304, %v263
      %vm408 = vcmp.eq.s32.totalorder %v304, %v264
      %vm409 = vcmp.eq.s32.totalorder %v304, %v265
      %vm410 = vcmp.eq.s32.totalorder %v304, %v266
      %vm411 = vcmp.eq.s32.totalorder %v304, %v267
      %vm412 = vcmp.eq.s32.totalorder %v304, %v268
      %vm413 = vcmp.eq.s32.totalorder %v307, %v261
      %vm414 = vcmp.eq.s32.totalorder %v307, %v262
      %vm415 = vcmp.eq.s32.totalorder %v307, %v263
      %vm416 = vcmp.eq.s32.totalorder %v307, %v264
      %vm417 = vcmp.eq.s32.totalorder %v307, %v265
      %vm418 = vcmp.eq.s32.totalorder %v307, %v266
      %vm419 = vcmp.eq.s32.totalorder %v307, %v267
      %vm420 = vcmp.eq.s32.totalorder %v307, %v268
      %vm421 = vcmp.eq.s32.totalorder %v310, %v261
      %vm422 = vcmp.eq.s32.totalorder %v310, %v262
      %vm423 = vcmp.eq.s32.totalorder %v310, %v263
      %vm424 = vcmp.eq.s32.totalorder %v310, %v264
      %vm425 = vcmp.eq.s32.totalorder %v310, %v265
      %vm426 = vcmp.eq.s32.totalorder %v310, %v266
      %vm427 = vcmp.eq.s32.totalorder %v310, %v267
      %vm428 = vcmp.eq.s32.totalorder %v310, %v268
      %vm429 = vcmp.eq.s32.totalorder %v313, %v261
      %vm430 = vcmp.eq.s32.totalorder %v313, %v262
      %vm431 = vcmp.eq.s32.totalorder %v313, %v263
      %vm432 = vcmp.eq.s32.totalorder %v313, %v264
      %vm433 = vcmp.eq.s32.totalorder %v313, %v265
      %vm434 = vcmp.eq.s32.totalorder %v313, %v266
      %vm435 = vcmp.eq.s32.totalorder %v313, %v267
      %vm436 = vcmp.eq.s32.totalorder %v313, %v268
      %vm437 = vcmp.eq.s32.totalorder %v316, %v261
      %vm438 = vcmp.eq.s32.totalorder %v316, %v262
      %vm439 = vcmp.eq.s32.totalorder %v316, %v263
      %vm440 = vcmp.eq.s32.totalorder %v316, %v264
      %vm441 = vcmp.eq.s32.totalorder %v316, %v265
      %vm442 = vcmp.eq.s32.totalorder %v316, %v266
      %vm443 = vcmp.eq.s32.totalorder %v316, %v267
      %vm444 = vcmp.eq.s32.totalorder %v316, %v268
      %v445 = vsel %vm317, 1, 0
      %v446 = vsel %vm318, 1, 0
      %v447 = vsel %vm319, 1, 0
      %v448 = vsel %vm320, 1, 0
      %v449 = vsel %vm321, 1, 0
      %v450 = vsel %vm322, 1, 0
      %v451 = vsel %vm323, 1, 0
      %v452 = vsel %vm324, 1, 0
      %v453 = vsel %vm325, 1, 0
      %v454 = vsel %vm326, 1, 0
      %v455 = vsel %vm327, 1, 0
      %v456 = vsel %vm328, 1, 0
      %v457 = vsel %vm329, 1, 0
      %v458 = vsel %vm330, 1, 0
      %v459 = vsel %vm331, 1, 0
      %v460 = vsel %vm332, 1, 0
      %v461 = vsel %vm333, 1, 0
      %v462 = vsel %vm334, 1, 0
      %v463 = vsel %vm335, 1, 0
      %v464 = vsel %vm336, 1, 0
      %v465 = vsel %vm337, 1, 0
      %v466 = vsel %vm338, 1, 0
      %v467 = vsel %vm339, 1, 0
      %v468 = vsel %vm340, 1, 0
      %v469 = vsel %vm341, 1, 0
      %v470 = vsel %vm342, 1, 0
      %v471 = vsel %vm343, 1, 0
      %v472 = vsel %vm344, 1, 0
      %v473 = vsel %vm345, 1, 0
      %v474 = vsel %vm346, 1, 0
      %v475 = vsel %vm347, 1, 0
      %v476 = vsel %vm348, 1, 0
      %v477 = vsel %vm349, 1, 0
      %v478 = vsel %vm350, 1, 0
      %v479 = vsel %vm351, 1, 0
      %v480 = vsel %vm352, 1, 0
      %v481 = vsel %vm353, 1, 0
      %v482 = vsel %vm354, 1, 0
      %v483 = vsel %vm355, 1, 0
      %v484 = vsel %vm356, 1, 0
      %v485 = vsel %vm357, 1, 0
      %v486 = vsel %vm358, 1, 0
      %v487 = vsel %vm359, 1, 0
      %v488 = vsel %vm360, 1, 0
      %v489 = vsel %vm361, 1, 0
      %v490 = vsel %vm362, 1, 0
      %v491 = vsel %vm363, 1, 0
      %v492 = vsel %vm364, 1, 0
      %v493 = vsel %vm365, 1, 0
      %v494 = vsel %vm366, 1, 0
      %v495 = vsel %vm367, 1, 0
      %v496 = vsel %vm368, 1, 0
      %v497 = vsel %vm369, 1, 0
      %v498 = vsel %vm370, 1, 0
      %v499 = vsel %vm371, 1, 0
      %v500 = vsel %vm372, 1, 0
      %v501 = vsel %vm373, 1, 0
      %v502 = vsel %vm374, 1, 0
      %v503 = vsel %vm375, 1, 0
      %v504 = vsel %vm376, 1, 0
      %v505 = vsel %vm377, 1, 0
      %v506 = vsel %vm378, 1, 0
      %v507 = vsel %vm379, 1, 0
      %v508 = vsel %vm380, 1, 0
      %v509 = vsel %vm381, 1, 0
      %v510 = vsel %vm382, 1, 0
      %v511 = vsel %vm383, 1, 0
      %v512 = vsel %vm384, 1, 0
      %v513 = vsel %vm385, 1, 0
      %v514 = vsel %vm386, 1, 0
      %v515 = vsel %vm387, 1, 0
      %v516 = vsel %vm388, 1, 0
      %v517 = vsel %vm389, 1, 0
      %v518 = vsel %vm390, 1, 0
      %v519 = vsel %vm391, 1, 0
      %v520 = vsel %vm392, 1, 0
      %v521 = vsel %vm393, 1, 0
      %v522 = vsel %vm394, 1, 0
      %v523 = vsel %vm395, 1, 0
      %v524 = vsel %vm396, 1, 0
      %v525 = vsel %vm397, 1, 0
      %v526 = vsel %vm398, 1, 0
      %v527 = vsel %vm399, 1, 0
      %v528 = vsel %vm400, 1, 0
      %v529 = vsel %vm401, 1, 0
      %v530 = vsel %vm402, 1, 0
      %v531 = vsel %vm403, 1, 0
      %v532 = vsel %vm404, 1, 0
      %v533 = vsel %vm405, 1, 0
      %v534 = vsel %vm406, 1, 0
      %v535 = vsel %vm407, 1, 0
      %v536 = vsel %vm408, 1, 0
      %v537 = vsel %vm409, 1, 0
      %v538 = vsel %vm410, 1, 0
      %v539 = vsel %vm411, 1, 0
      %v540 = vsel %vm412, 1, 0
      %v541 = vsel %vm413, 1, 0
      %v542 = vsel %vm414, 1, 0
      %v543 = vsel %vm415, 1, 0
      %v544 = vsel %vm416, 1, 0
      %v545 = vsel %vm417, 1, 0
      %v546 = vsel %vm418, 1, 0
      %v547 = vsel %vm419, 1, 0
      %v548 = vsel %vm420, 1, 0
      %v549 = vsel %vm421, 1, 0
      %v550 = vsel %vm422, 1, 0
      %v551 = vsel %vm423, 1, 0
      %v552 = vsel %vm424, 1, 0
      %v553 = vsel %vm425, 1, 0
      %v554 = vsel %vm426, 1, 0
      %v555 = vsel %vm427, 1, 0
      %v556 = vsel %vm428, 1, 0
      %v557 = vsel %vm429, 1, 0
      %v558 = vsel %vm430, 1, 0
      %v559 = vsel %vm431, 1, 0
      %v560 = vsel %vm432, 1, 0
      %v561 = vsel %vm433, 1, 0
      %v562 = vsel %vm434, 1, 0
      %v563 = vsel %vm435, 1, 0
      %v564 = vsel %vm436, 1, 0
      %v565 = vsel %vm437, 1, 0
      %v566 = vsel %vm438, 1, 0
      %v567 = vsel %vm439, 1, 0
      %v568 = vsel %vm440, 1, 0
      %v569 = vsel %vm441, 1, 0
      %v570 = vsel %vm442, 1, 0
      %v571 = vsel %vm443, 1, 0
      %v572 = vsel %vm444, 1, 0
      %v573 = vcvt.s32.f32 %v445
      %v574 = vcvt.s32.f32 %v446
      %v575 = vcvt.s32.f32 %v447
      %v576 = vcvt.s32.f32 %v448
      %v577 = vcvt.s32.f32 %v449
      %v578 = vcvt.s32.f32 %v450
      %v579 = vcvt.s32.f32 %v451
      %v580 = vcvt.s32.f32 %v452
      %v581 = vcvt.s32.f32 %v453
      %v582 = vcvt.s32.f32 %v454
      %v583 = vcvt.s32.f32 %v455
      %v584 = vcvt.s32.f32 %v456
      %v585 = vcvt.s32.f32 %v457
      %v586 = vcvt.s32.f32 %v458
      %v587 = vcvt.s32.f32 %v459
      %v588 = vcvt.s32.f32 %v460
      %v589 = vcvt.s32.f32 %v461
      %v590 = vcvt.s32.f32 %v462
      %v591 = vcvt.s32.f32 %v463
      %v592 = vcvt.s32.f32 %v464
      %v593 = vcvt.s32.f32 %v465
      %v594 = vcvt.s32.f32 %v466
      %v595 = vcvt.s32.f32 %v467
      %v596 = vcvt.s32.f32 %v468
      %v597 = vcvt.s32.f32 %v469
      %v598 = vcvt.s32.f32 %v470
      %v599 = vcvt.s32.f32 %v471
      %v600 = vcvt.s32.f32 %v472
      %v601 = vcvt.s32.f32 %v473
      %v602 = vcvt.s32.f32 %v474
      %v603 = vcvt.s32.f32 %v475
      %v604 = vcvt.s32.f32 %v476
      %v605 = vcvt.s32.f32 %v477
      %v606 = vcvt.s32.f32 %v478
      %v607 = vcvt.s32.f32 %v479
      %v608 = vcvt.s32.f32 %v480
      %v609 = vcvt.s32.f32 %v481
      %v610 = vcvt.s32.f32 %v482
      %v611 = vcvt.s32.f32 %v483
      %v612 = vcvt.s32.f32 %v484
      %v613 = vcvt.s32.f32 %v485
      %v614 = vcvt.s32.f32 %v486
      %v615 = vcvt.s32.f32 %v487
      %v616 = vcvt.s32.f32 %v488
      %v617 = vcvt.s32.f32 %v489
      %v618 = vcvt.s32.f32 %v490
      %v619 = vcvt.s32.f32 %v491
      %v620 = vcvt.s32.f32 %v492
      %v621 = vcvt.s32.f32 %v493
      %v622 = vcvt.s32.f32 %v494
      %v623 = vcvt.s32.f32 %v495
      %v624 = vcvt.s32.f32 %v496
      %v625 = vcvt.s32.f32 %v497
      %v626 = vcvt.s32.f32 %v498
      %v627 = vcvt.s32.f32 %v499
      %v628 = vcvt.s32.f32 %v500
      %v629 = vcvt.s32.f32 %v501
      %v630 = vcvt.s32.f32 %v502
      %v631 = vcvt.s32.f32 %v503
      %v632 = vcvt.s32.f32 %v504
      %v633 = vcvt.s32.f32 %v505
      %v634 = vcvt.s32.f32 %v506
      %v635 = vcvt.s32.f32 %v507
      %v636 = vcvt.s32.f32 %v508
      %v637 = vcvt.s32.f32 %v509
      %v638 = vcvt.s32.f32 %v510
      %v639 = vcvt.s32.f32 %v511
      %v640 = vcvt.s32.f32 %v512
      %v641 = vcvt.s32.f32 %v513
      %v642 = vcvt.s32.f32 %v514
      %v643 = vcvt.s32.f32 %v515
      %v644 = vcvt.s32.f32 %v516
      %v645 = vcvt.s32.f32 %v517
      %v646 = vcvt.s32.f32 %v518
      %v647 = vcvt.s32.f32 %v519
      %v648 = vcvt.s32.f32 %v520
      %v649 = vcvt.s32.f32 %v521
      %v650 = vcvt.s32.f32 %v522
      %v651 = vcvt.s32.f32 %v523
      %v652 = vcvt.s32.f32 %v524
      %v653 = vcvt.s32.f32 %v525
      %v654 = vcvt.s32.f32 %v526
      %v655 = vcvt.s32.f32 %v527
      %v656 = vcvt.s32.f32 %v528
      %v657 = vcvt.s32.f32 %v529
      %v658 = vcvt.s32.f32 %v530
      %v659 = vcvt.s32.f32 %v531
      %v660 = vcvt.s32.f32 %v532
      %v661 = vcvt.s32.f32 %v533
      %v662 = vcvt.s32.f32 %v534
      %v663 = vcvt.s32.f32 %v535
      %v664 = vcvt.s32.f32 %v536
      %v665 = vcvt.s32.f32 %v537
      %v666 = vcvt.s32.f32 %v538
      %v667 = vcvt.s32.f32 %v539
      %v668 = vcvt.s32.f32 %v540
      %v669 = vcvt.s32.f32 %v541
      %v670 = vcvt.s32.f32 %v542
      %v671 = vcvt.s32.f32 %v543
      %v672 = vcvt.s32.f32 %v544
      %v673 = vcvt.s32.f32 %v545
      %v674 = vcvt.s32.f32 %v546
      %v675 = vcvt.s32.f32 %v547
      %v676 = vcvt.s32.f32 %v548
      %v677 = vcvt.s32.f32 %v549
      %v678 = vcvt.s32.f32 %v550
      %v679 = vcvt.s32.f32 %v551
      %v680 = vcvt.s32.f32 %v552
      %v681 = vcvt.s32.f32 %v553
      %v682 = vcvt.s32.f32 %v554
      %v683 = vcvt.s32.f32 %v555
      %v684 = vcvt.s32.f32 %v556
      %v685 = vcvt.s32.f32 %v557
      %v686 = vcvt.s32.f32 %v558
      %v687 = vcvt.s32.f32 %v559
      %v688 = vcvt.s32.f32 %v560
      %v689 = vcvt.s32.f32 %v561
      %v690 = vcvt.s32.f32 %v562
      %v691 = vcvt.s32.f32 %v563
      %v692 = vcvt.s32.f32 %v564
      %v693 = vcvt.s32.f32 %v565
      %v694 = vcvt.s32.f32 %v566
      %v695 = vcvt.s32.f32 %v567
      %v696 = vcvt.s32.f32 %v568
      %v697 = vcvt.s32.f32 %v569
      %v698 = vcvt.s32.f32 %v570
      %v699 = vcvt.s32.f32 %v571
      %v700 = vcvt.s32.f32 %v572
      %v701 = vld [vmem:[#allocation2] sm:$0x77]
      %v702 = vld [vmem:[#allocation2 + $0x8] sm:$0x77]
      %v703 = vld [vmem:[#allocation2 + $0x10] sm:$0x77]
      %v704 = vld [vmem:[#allocation2 + $0x18] sm:$0x77]
      %v705 = vld [vmem:[%s207] sm:$0x7]
      %706 = vmatprep.subr.mxu0 %v694
      %707 = vmatpush1.msra.mxu0 %v693
      %708 = vmatprep.subr.mxu0 %v686
      %709 = vmatpush1.msra.mxu0 %v685
      %710 = vmatprep.subr.mxu0 %v678
      %711 = vmatpush1.msra.mxu0 %v677
      %712 = vmatprep.subr.mxu0 %v670
      %713 = vmatpush1.msra.mxu0 %v669
      %714 = vmatprep.subr.mxu0 %v662
      %715 = vmatpush1.msra.mxu0 %v661
      %716 = vmatprep.subr.mxu0 %v654
      %717 = vmatpush1.msra.mxu0 %v653
      %718 = vmatprep.subr.mxu0 %v646
      %719 = vmatpush1.msra.mxu0 %v645
      %720 = vmatprep.subr.mxu0 %v638
      %721 = vmatpush1.msra.mxu0 %v637
      %722 = vmatprep.subr.mxu0 %v630
      %723 = vmatpush1.msra.mxu0 %v629
      %724 = vmatprep.subr.mxu0 %v622
      %725 = vmatpush1.msra.mxu0 %v621
      %726 = vmatprep.subr.mxu0 %v614
      %727 = vmatpush1.msra.mxu0 %v613
      %728 = vmatprep.subr.mxu0 %v606
      %729 = vmatpush1.msra.mxu0 %v605
      %730 = vmatprep.subr.mxu0 %v598
      %731 = vmatpush1.msra.mxu0 %v597
      %732 = vmatprep.subr.mxu0 %v590
      %733 = vmatpush1.msra.mxu0 %v589
      %734 = vmatprep.subr.mxu0 %v582
      %735 = vmatpush1.msra.mxu0 %v581
      %736 = vmatprep.subr.mxu0 %v574
      %737 = vmatpush1.msra.mxu0 %v573
      %738 = vmatprep.subr.mxu0 0.0
      %739 = vmatpush2.msra.mxu0 0.0
      %740 = vmatprep.subr.mxu0 0.0
      %741 = vmatpush2.msra.mxu0 0.0
      %742 = vmatprep.subr.mxu0 0.0
      %743 = vmatpush2.msra.mxu0 0.0
      %744 = vmatprep.subr.mxu0 0.0
      %745 = vmatpush2.msra.mxu0 0.0
      %746 = vmatprep.subr.mxu0 0.0
      %747 = vmatpush2.msra.mxu0 0.0
      %748 = vmatprep.subr.mxu0 0.0
      %749 = vmatpush2.msra.mxu0 0.0
      %750 = vmatprep.subr.mxu0 0.0
      %751 = vmatpush2.msra.mxu0 0.0
      %752 = vmatprep.subr.mxu0 0.0
      %753 = vmatpush2.msra.mxu0 0.0
      %754 = vmatprep.subr.mxu0 0.0
      %755 = vmatpush2.msra.mxu0 0.0
      %756 = vmatprep.subr.mxu0 0.0
      %757 = vmatpush2.msra.mxu0 0.0
      %758 = vmatprep.subr.mxu0 0.0
      %759 = vmatpush2.msra.mxu0 0.0
      %760 = vmatprep.subr.mxu0 0.0
      %761 = vmatpush2.msra.mxu0 0.0
      %762 = vmatprep.subr.mxu0 0.0
      %763 = vmatpush2.msra.mxu0 0.0
      %764 = vmatprep.subr.mxu0 0.0
      %765 = vmatpush2.msra.mxu0 0.0
      %766 = vmatprep.subr.mxu0 0.0
      %767 = vmatpush2.msra.mxu0 0.0
      %768 = vmatprep.subr.mxu0 0.0
      %769 = vmatpush2.msra.mxu0 0.0
      %770 = vmatprep.mubr.f32.mxu0 0.0
      %771 = vmatmul.mubr.f32.gmra.mxu0 %v705
      %v772 = vpop.f32.mrf.mxu0
      %v773 = vadd.f32 0.0, %v772
      %v774 = vpop.f32.mrf.mxu0
      %v775 = vadd.f32 0.0, %v774
      %776 = vdwg.mxu0
      %777 = vmatprep.subr.mxu0 %v696
      %778 = vmatpush1.msra.mxu0 %v695
      %779 = vmatprep.subr.mxu0 %v688
      %780 = vmatpush1.msra.mxu0 %v687
      %781 = vmatprep.subr.mxu0 %v680
      %782 = vmatpush1.msra.mxu0 %v679
      %783 = vmatprep.subr.mxu0 %v672
      %784 = vmatpush1.msra.mxu0 %v671
      %785 = vmatprep.subr.mxu0 %v664
      %786 = vmatpush1.msra.mxu0 %v663
      %787 = vmatprep.subr.mxu0 %v656
      %788 = vmatpush1.msra.mxu0 %v655
      %789 = vmatprep.subr.mxu0 %v648
      %790 = vmatpush1.msra.mxu0 %v647
      %791 = vmatprep.subr.mxu0 %v640
      %792 = vmatpush1.msra.mxu0 %v639
      %793 = vmatprep.subr.mxu0 %v632
      %794 = vmatpush1.msra.mxu0 %v631
      %795 = vmatprep.subr.mxu0 %v624
      %796 = vmatpush1.msra.mxu0 %v623
      %797 = vmatprep.subr.mxu0 %v616
      %798 = vmatpush1.msra.mxu0 %v615
      %799 = vmatprep.subr.mxu0 %v608
      %800 = vmatpush1.msra.mxu0 %v607
      %801 = vmatprep.subr.mxu0 %v600
      %802 = vmatpush1.msra.mxu0 %v599
      %803 = vmatprep.subr.mxu0 %v592
      %804 = vmatpush1.msra.mxu0 %v591
      %805 = vmatprep.subr.mxu0 %v584
      %806 = vmatpush1.msra.mxu0 %v583
      %807 = vmatprep.subr.mxu0 %v576
      %808 = vmatpush1.msra.mxu0 %v575
      %809 = vmatprep.subr.mxu0 0.0
      %810 = vmatpush2.msra.mxu0 0.0
      %811 = vmatprep.subr.mxu0 0.0
      %812 = vmatpush2.msra.mxu0 0.0
      %813 = vmatprep.subr.mxu0 0.0
      %814 = vmatpush2.msra.mxu0 0.0
      %815 = vmatprep.subr.mxu0 0.0
      %816 = vmatpush2.msra.mxu0 0.0
      %817 = vmatprep.subr.mxu0 0.0
      %818 = vmatpush2.msra.mxu0 0.0
      %819 = vmatprep.subr.mxu0 0.0
      %820 = vmatpush2.msra.mxu0 0.0
      %821 = vmatprep.subr.mxu0 0.0
      %822 = vmatpush2.msra.mxu0 0.0
      %823 = vmatprep.subr.mxu0 0.0
      %824 = vmatpush2.msra.mxu0 0.0
      %825 = vmatprep.subr.mxu0 0.0
      %826 = vmatpush2.msra.mxu0 0.0
      %827 = vmatprep.subr.mxu0 0.0
      %828 = vmatpush2.msra.mxu0 0.0
      %829 = vmatprep.subr.mxu0 0.0
      %830 = vmatpush2.msra.mxu0 0.0
      %831 = vmatprep.subr.mxu0 0.0
      %832 = vmatpush2.msra.mxu0 0.0
      %833 = vmatprep.subr.mxu0 0.0
      %834 = vmatpush2.msra.mxu0 0.0
      %835 = vmatprep.subr.mxu0 0.0
      %836 = vmatpush2.msra.mxu0 0.0
      %837 = vmatprep.subr.mxu0 0.0
      %838 = vmatpush2.msra.mxu0 0.0
      %839 = vmatprep.subr.mxu0 0.0
      %840 = vmatpush2.msra.mxu0 0.0
      %841 = vmatprep.mubr.f32.mxu0 0.0
      %842 = vmatmul.mubr.f32.gmra.mxu0 %v705
      %v843 = vpop.f32.mrf.mxu0
      %v844 = vadd.f32 0.0, %v843
      %v845 = vpop.f32.mrf.mxu0
      %v846 = vadd.f32 0.0, %v845
      %847 = vdwg.mxu0
      %848 = vmatprep.subr.mxu0 %v698
      %849 = vmatpush1.msra.mxu0 %v697
      %850 = vmatprep.subr.mxu0 %v690
      %851 = vmatpush1.msra.mxu0 %v689
      %852 = vmatprep.subr.mxu0 %v682
      %853 = vmatpush1.msra.mxu0 %v681
      %854 = vmatprep.subr.mxu0 %v674
      %855 = vmatpush1.msra.mxu0 %v673
      %856 = vmatprep.subr.mxu0 %v666
      %857 = vmatpush1.msra.mxu0 %v665
      %858 = vmatprep.subr.mxu0 %v658
      %859 = vmatpush1.msra.mxu0 %v657
      %860 = vmatprep.subr.mxu0 %v650
      %861 = vmatpush1.msra.mxu0 %v649
      %862 = vmatprep.subr.mxu0 %v642
      %863 = vmatpush1.msra.mxu0 %v641
      %864 = vmatprep.subr.mxu0 %v634
      %865 = vmatpush1.msra.mxu0 %v633
      %866 = vmatprep.subr.mxu0 %v626
      %867 = vmatpush1.msra.mxu0 %v625
      %868 = vmatprep.subr.mxu0 %v618
      %869 = vmatpush1.msra.mxu0 %v617
      %870 = vmatprep.subr.mxu0 %v610
      %871 = vmatpush1.msra.mxu0 %v609
      %872 = vmatprep.subr.mxu0 %v602
      %873 = vmatpush1.msra.mxu0 %v601
      %874 = vmatprep.subr.mxu0 %v594
      %875 = vmatpush1.msra.mxu0 %v593
      %876 = vmatprep.subr.mxu0 %v586
      %877 = vmatpush1.msra.mxu0 %v585
      %878 = vmatprep.subr.mxu0 %v578
      %879 = vmatpush1.msra.mxu0 %v577
      %880 = vmatprep.subr.mxu0 0.0
      %881 = vmatpush2.msra.mxu0 0.0
      %882 = vmatprep.subr.mxu0 0.0
      %883 = vmatpush2.msra.mxu0 0.0
      %884 = vmatprep.subr.mxu0 0.0
      %885 = vmatpush2.msra.mxu0 0.0
      %886 = vmatprep.subr.mxu0 0.0
      %887 = vmatpush2.msra.mxu0 0.0
      %888 = vmatprep.subr.mxu0 0.0
      %889 = vmatpush2.msra.mxu0 0.0
      %890 = vmatprep.subr.mxu0 0.0
      %891 = vmatpush2.msra.mxu0 0.0
      %892 = vmatprep.subr.mxu0 0.0
      %893 = vmatpush2.msra.mxu0 0.0
      %894 = vmatprep.subr.mxu0 0.0
      %895 = vmatpush2.msra.mxu0 0.0
      %896 = vmatprep.subr.mxu0 0.0
      %897 = vmatpush2.msra.mxu0 0.0
      %898 = vmatprep.subr.mxu0 0.0
      %899 = vmatpush2.msra.mxu0 0.0
      %900 = vmatprep.subr.mxu0 0.0
      %901 = vmatpush2.msra.mxu0 0.0
      %902 = vmatprep.subr.mxu0 0.0
      %903 = vmatpush2.msra.mxu0 0.0
      %904 = vmatprep.subr.mxu0 0.0
      %905 = vmatpush2.msra.mxu0 0.0
      %906 = vmatprep.subr.mxu0 0.0
      %907 = vmatpush2.msra.mxu0 0.0
      %908 = vmatprep.subr.mxu0 0.0
      %909 = vmatpush2.msra.mxu0 0.0
      %910 = vmatprep.subr.mxu0 0.0
      %911 = vmatpush2.msra.mxu0 0.0
      %912 = vmatprep.mubr.f32.mxu0 0.0
      %913 = vmatmul.mubr.f32.gmra.mxu0 %v705
      %v914 = vpop.f32.mrf.mxu0
      %v915 = vadd.f32 0.0, %v914
      %v916 = vpop.f32.mrf.mxu0
      %v917 = vadd.f32 0.0, %v916
      %918 = vdwg.mxu0
      %919 = vmatprep.subr.mxu0 %v700
      %920 = vmatpush1.msra.mxu0 %v699
      %921 = vmatprep.subr.mxu0 %v692
      %922 = vmatpush1.msra.mxu0 %v691
      %923 = vmatprep.subr.mxu0 %v684
      %924 = vmatpush1.msra.mxu0 %v683
      %925 = vmatprep.subr.mxu0 %v676
      %926 = vmatpush1.msra.mxu0 %v675
      %927 = vmatprep.subr.mxu0 %v668
      %928 = vmatpush1.msra.mxu0 %v667
      %929 = vmatprep.subr.mxu0 %v660
      %930 = vmatpush1.msra.mxu0 %v659
      %931 = vmatprep.subr.mxu0 %v652
      %932 = vmatpush1.msra.mxu0 %v651
      %933 = vmatprep.subr.mxu0 %v644
      %934 = vmatpush1.msra.mxu0 %v643
      %935 = vmatprep.subr.mxu0 %v636
      %936 = vmatpush1.msra.mxu0 %v635
      %937 = vmatprep.subr.mxu0 %v628
      %938 = vmatpush1.msra.mxu0 %v627
      %939 = vmatprep.subr.mxu0 %v620
      %940 = vmatpush1.msra.mxu0 %v619
      %941 = vmatprep.subr.mxu0 %v612
      %942 = vmatpush1.msra.mxu0 %v611
      %943 = vmatprep.subr.mxu0 %v604
      %944 = vmatpush1.msra.mxu0 %v603
      %945 = vmatprep.subr.mxu0 %v596
      %946 = vmatpush1.msra.mxu0 %v595
      %947 = vmatprep.subr.mxu0 %v588
      %948 = vmatpush1.msra.mxu0 %v587
      %949 = vmatprep.subr.mxu0 %v580
      %950 = vmatpush1.msra.mxu0 %v579
      %951 = vmatprep.subr.mxu0 0.0
      %952 = vmatpush2.msra.mxu0 0.0
      %953 = vmatprep.subr.mxu0 0.0
      %954 = vmatpush2.msra.mxu0 0.0
      %955 = vmatprep.subr.mxu0 0.0
      %956 = vmatpush2.msra.mxu0 0.0
      %957 = vmatprep.subr.mxu0 0.0
      %958 = vmatpush2.msra.mxu0 0.0
      %959 = vmatprep.subr.mxu0 0.0
      %960 = vmatpush2.msra.mxu0 0.0
      %961 = vmatprep.subr.mxu0 0.0
      %962 = vmatpush2.msra.mxu0 0.0
      %963 = vmatprep.subr.mxu0 0.0
      %964 = vmatpush2.msra.mxu0 0.0
      %965 = vmatprep.subr.mxu0 0.0
      %966 = vmatpush2.msra.mxu0 0.0
      %967 = vmatprep.subr.mxu0 0.0
      %968 = vmatpush2.msra.mxu0 0.0
      %969 = vmatprep.subr.mxu0 0.0
      %970 = vmatpush2.msra.mxu0 0.0
      %971 = vmatprep.subr.mxu0 0.0
      %972 = vmatpush2.msra.mxu0 0.0
      %973 = vmatprep.subr.mxu0 0.0
      %974 = vmatpush2.msra.mxu0 0.0
      %975 = vmatprep.subr.mxu0 0.0
      %976 = vmatpush2.msra.mxu0 0.0
      %977 = vmatprep.subr.mxu0 0.0
      %978 = vmatpush2.msra.mxu0 0.0
      %979 = vmatprep.subr.mxu0 0.0
      %980 = vmatpush2.msra.mxu0 0.0
      %981 = vmatprep.subr.mxu0 0.0
      %982 = vmatpush2.msra.mxu0 0.0
      %983 = vmatprep.mubr.f32.mxu0 0.0
      %984 = vmatmul.mubr.f32.gmra.mxu0 %v705
      %v985 = vpop.f32.mrf.mxu0
      %v986 = vadd.f32 0.0, %v985
      %v987 = vpop.f32.mrf.mxu0
      %v988 = vadd.f32 0.0, %v987
      %989 = vdwg.mxu0
      %v998 = vcombine.low %v773, %v775
      %v999 = vcombine.low %v844, %v846
      %v1000 = vcombine.low %v915, %v917
      %v1001 = vcombine.low %v986, %v988
      %v1006 = vadd.f32 %v701, %v998
      %v1007 = vadd.f32 %v702, %v999
      %v1008 = vadd.f32 %v703, %v1000
      %v1009 = vadd.f32 %v704, %v1001
      %1010 = vst [vmem:[#allocation2] sm:$0x77] %v1006
      %1011 = vst [vmem:[#allocation2 + $0x8] sm:$0x77] %v1007
      %1012 = vst [vmem:[#allocation2 + $0x10] sm:$0x77] %v1008
      %1013 = vst [vmem:[#allocation2 + $0x18] sm:$0x77] %v1009
      // Predicated region
      $region33: #{tpu_custom_call.1} parent=27 // pred_check
        %p1014 = pneg %p218
      $region34: #{tpu_custom_call.1} parent=27 // pred_check_branch
        %1016 = sbr.rel (%p1014) target = $region36
      $region35: #{tpu_custom_call.1} parent=27 // pred_region
        %v1017 = vld [vmem:[#allocation2] sm:$0x77]
        %v1018 = vld [vmem:[#allocation2 + $0x8] sm:$0x77]
        %v1019 = vld [vmem:[#allocation2 + $0x10] sm:$0x77]
        %v1020 = vld [vmem:[#allocation2 + $0x18] sm:$0x77]
        %1021 = vst [vmem:[%s216] sm:$0x77] %v1017
        %1022 = vst [vmem:[%s216 + $0x8] sm:$0x77] %v1018
        %1023 = vst [vmem:[%s216 + $0x10] sm:$0x77] %v1019
        %1024 = vst [vmem:[%s216 + $0x18] sm:$0x77] %v1020
      $region36: #{tpu_custom_call.1} parent=27 // pred_fallthru
        _
      %s1025 = smul.u32 8, %s19
      %p1026 = scmp.lt.s32.totalorder %s18, 0
      %s1027 = scalar_select %p1026, %s18, 0
      %p1028 = scmp.lt.s32.totalorder %s1025, 31
      %s1029 = scalar_select %p1028, %s1025, 31
      %s1030 = smul.addr %s1027, 32
      %s1031 = sadd.s32 %s1029, %s1030
      %s1032 = smul.addr %s1031, 4
      %s1033 = scalar_lea.vmem %s2, %s1032
      // Predicated region
      $region37: #{tpu_custom_call.1} parent=27 // pred_check
        %p1034 = pneg %p108
      $region38: #{tpu_custom_call.1} parent=27 // pred_check_branch
        %1036 = sbr.rel (%p1034) target = $region40
      $region39: #{tpu_custom_call.1} parent=27 // pred_region
        %s1037 = smul.u32 8, %s19
      $region40: #{tpu_custom_call.1} parent=27 // pred_fallthru
        _
    $region28: #{tpu_custom_call.1} parent=5 // pred_fallthru
      _
    %p1038 = scmp.le.s32.totalorder 2, %s8
    // Predicated region
    $region41: #{tpu_custom_call.1} parent=5 // pred_check
      %p1039 = pneg %p1038
    $region42: #{tpu_custom_call.1} parent=5 // pred_check_branch
      %1041 = sbr.rel (%p1039) target = $region44
    $region43: #{tpu_custom_call.1} parent=5 // pred_region
      %s1042 = ssub.s32 %s8, 2
      // Predicated region
      $region45: #{tpu_custom_call.1} parent=43 // pred_check
        %p1043 = pneg %p114
      $region46: #{tpu_custom_call.1} parent=43 // pred_check_branch
        %1045 = sbr.rel (%p1043) target = $region48
      $region47: #{tpu_custom_call.1} parent=43 // pred_region
        %s1046 = smul.u32 8, %s22
        %p1047 = scmp.lt.s32.totalorder %s21, 0
        %s1048 = scalar_select %p1047, %s21, 0
        %p1049 = scmp.lt.s32.totalorder %s1046, 31
        %s1050 = scalar_select %p1049, %s1046, 31
        %s1051 = smul.addr %s1048, 32
        %s1052 = sadd.s32 %s1050, %s1051
        %s1053 = smul.addr %s1052, 4
        %s1054 = scalar_lea.vmem %s2, %s1053
      $region48: #{tpu_custom_call.1} parent=43 // pred_fallthru
        _
    $region44: #{tpu_custom_call.1} parent=5 // pred_fallthru
      _
  $region6: #{tpu_custom_call.1} parent=0 // loop_footer
    %s12 = sadd.s32 1, %s8
  $region7: #{tpu_custom_call.1} parent=0 // loop_footer_branch
    %7 = sbr.rel target = $region3
  $region8: #{tpu_custom_call.1} parent=0 // loop_exit
    _

</llo_original>
